<compile_context>
chip_gen: v6e
topology: v6e:2x2x1
jax: 0.10.0
libtpu: 0.0.40
codegen_flags: <defaults>
</compile_context>

<pallas_src>
import functools

import jax
import jax.numpy as jnp
from jax.experimental import pallas as pl
from jax.experimental.pallas import tpu as pltpu

LANES = 128     # lane width
TM_MAX = 512    # rows per tile: (512, 128) f32 = 256 KiB per input block
NC = 2          # leading "parallel" grid axis (dual TensorCore on v7x)


def _iou_kernel(x_ref, t_ref, out_ref, acc_i_ref, acc_t_ref, *,
                tm, tiles_per_core, full_rows, rem, needs_mask):
    c = pl.program_id(0)        # core-split index ("parallel")
    j = pl.program_id(1)        # tile index within this core ("arbitrary")

    @pl.when(j == 0)
    def _():
        acc_i_ref[...] = jnp.zeros_like(acc_i_ref)
        acc_t_ref[...] = jnp.zeros_like(acc_t_ref)

    p = jax.nn.sigmoid(x_ref[...].astype(jnp.float32))
    t = t_ref[...].astype(jnp.float32)

    if needs_mask:
        # Mask lane-padding, the ragged overhang of the last block, and any
        # duplicated (clamped) spare tiles on the second core.
        tile = c * tiles_per_core + j            # logical (unclamped) tile id
        row = jax.lax.broadcasted_iota(jnp.int32, (tm, LANES), 0)
        lane = jax.lax.broadcasted_iota(jnp.int32, (tm, LANES), 1)
        grow = tile * tm + row                   # global row index
        valid = (grow < full_rows) | ((grow == full_rows) & (lane < rem))
        p = jnp.where(valid, p, 0.0)
        t = jnp.where(valid, t, 0.0)

    # Pure elementwise VPU accumulation; cross-lane reduce deferred to epilogue.
    acc_i_ref[...] += p * t        # intersection partials
    acc_t_ref[...] += p + t        # total partials

    @pl.when(j == pl.num_programs(1) - 1)
    def _():
        inter = jnp.sum(acc_i_ref[...])
        total = jnp.sum(acc_t_ref[...])
        sel = jax.lax.broadcasted_iota(jnp.int32, out_ref.shape, 1)
        # row 0 of this core's output block = intersection, row 1 = total
        out_ref[...] = jnp.where(sel == 0, inter, total)


def iou_loss(inputs, targets, smooth=1.0):
    """Pallas TPU IoU loss. `inputs` are raw logits (sigmoid applied in-kernel)."""
    x = inputs.reshape(-1)          # keep native dtype; cast happens in-kernel
    t = targets.reshape(-1)
    n = x.shape[0]

    # Pad only up to the next 128-lane multiple (< 128 elements); usually the
    # reshape below is free. Padded elements are masked out in-kernel.
    rows = pl.cdiv(n, LANES)
    pad = rows * LANES - n
    if pad:
        x = jnp.pad(x, (0, pad))
        t = jnp.pad(t, (0, pad))
    x2 = x.reshape(rows, LANES)
    t2 = t.reshape(rows, LANES)

    tm = rows if rows <= TM_MAX else TM_MAX
    num_tiles = pl.cdiv(rows, tm)
    nc = NC if num_tiles >= NC else 1
    tiles_per_core = pl.cdiv(num_tiles, nc)

    full_rows = n // LANES
    rem = n % LANES
    needs_mask = (rem != 0) or (rows % tm != 0) or (num_tiles % nc != 0)

    kernel = functools.partial(
        _iou_kernel, tm=tm, tiles_per_core=tiles_per_core,
        full_rows=full_rows, rem=rem, needs_mask=needs_mask)

    def in_map(c, j):
        # Clamp spare tiles (when num_tiles % nc != 0) onto the last real block;
        # their contribution is fully masked out in-kernel.
        return (jnp.minimum(c * tiles_per_core + j, num_tiles - 1), 0)

    out = pl.pallas_call(
        kernel,
        out_shape=jax.ShapeDtypeStruct((nc, 8, LANES), jnp.float32),
        grid_spec=pltpu.PrefetchScalarGridSpec(
            num_scalar_prefetch=0,
            grid=(nc, tiles_per_core),
            in_specs=[
                pl.BlockSpec((tm, LANES), in_map),
                pl.BlockSpec((tm, LANES), in_map),
            ],
            out_specs=pl.BlockSpec((1, 8, LANES), lambda c, j: (c, 0, 0)),
            scratch_shapes=[
                pltpu.VMEM((tm, LANES), jnp.float32),   # intersection partials
                pltpu.VMEM((tm, LANES), jnp.float32),   # total partials
            ],
        ),
        compiler_params=pltpu.CompilerParams(
            dimension_semantics=("parallel", "arbitrary"),
        ),
    )(x2, t2)

    # Combine the per-core partials (scalar epilogue in the wrapper).
    inter = jnp.sum(out[:, 0, 0])
    total = jnp.sum(out[:, 1, 0])
    union = total - inter
    smooth = jnp.float32(smooth)
    return 1.0 - (inter + smooth) / (union + smooth)


def iou_loss_ref(inputs, targets, smooth=1.0):
    p = jax.nn.sigmoid(inputs.astype(jnp.float32)).reshape(-1)
    t = targets.astype(jnp.float32).reshape(-1)
    inter = jnp.sum(p * t)
    total = jnp.sum(p + t)
    union = total - inter
    return 1.0 - (inter + smooth) / (union + smooth)


if __name__ == "__main__":
    key = jax.random.PRNGKey(0)
    k1, k2 = jax.random.split(key)
    # NCHW-shaped segmentation logits / binary targets
    x = jax.random.normal(k1, (2, 4, 16, 16), dtype=jnp.float32)
    tgt = (jax.random.uniform(k2, (2, 4, 16, 16)) > 0.5).astype(jnp.float32)

    loss = jax.block_until_ready(iou_loss(x, tgt))
    ref = jax.block_until_ready(iou_loss_ref(x, tgt))
    assert jnp.allclose(loss, ref, atol=1e-5, rtol=1e-5), (loss, ref)

    # Extra shapes: masked ragged tail, and multi-tile / dual-core split path.
    for shape in [(2, 3, 15, 17), (2, 4, 96, 96)]:
        ka, kb = jax.random.split(jax.random.PRNGKey(1))
        xs = jax.random.normal(ka, shape, dtype=jnp.float32)
        ts = (jax.random.uniform(kb, shape) > 0.5).astype(jnp.float32)
        l = jax.block_until_ready(iou_loss(xs, ts))
        r = jax.block_until_ready(iou_loss_ref(xs, ts))
        assert jnp.allclose(l, r, atol=1e-5, rtol=1e-5), (shape, l, r)

    print("KERNEL_OK")
</pallas_src>

<mosaic_0001>
module attributes {stable_mosaic.version = 11 : i64} {
  func.func @_iou_kernel(%arg0: i32, %arg1: i32, %arg2: memref<16x128xf32, #tpu.memory_space<vmem>>, %arg3: memref<16x128xf32, #tpu.memory_space<vmem>>, %arg4: memref<1x8x128xf32, #tpu.memory_space<vmem>>, %arg5: memref<16x128xf32, #tpu.memory_space<vmem>>, %arg6: memref<16x128xf32, #tpu.memory_space<vmem>>) attributes {dimension_semantics = [#tpu.dimension_semantics<parallel>, #tpu.dimension_semantics<arbitrary>], iteration_bounds = array<i64: 1, 1>, scalar_prefetch = 0 : i64, scratch_operands = 2 : i64, tpu.core_type = #tpu.core_type<tc>, window_params = [{transform_indices = @transform_0, window_bounds = array<i64: 16, 128>}, {transform_indices = @transform_1, window_bounds = array<i64: 16, 128>}, {transform_indices = @transform_2, window_bounds = array<i64: 1, 8, 128>}]} {
    %c0_i32 = arith.constant 0 : i32
    %0 = arith.cmpi eq, %arg1, %c0_i32 : i32
    %1 = arith.extui %0 : i1 to i32
    %c0_i32_0 = arith.constant 0 : i32
    %2 = arith.cmpi ne, %1, %c0_i32_0 : i32
    scf.if %2 {
      %cst_14 = arith.constant 0.000000e+00 : f32
      %21 = vector.broadcast %cst_14 : f32 to vector<16x128xf32>
      %c0_15 = arith.constant 0 : index
      %c0_16 = arith.constant 0 : index
      %22 = vector.load %arg5[%c0_15, %c0_16] : memref<16x128xf32, #tpu.memory_space<vmem>>, vector<16x128xf32>
      tpu.vector_store %arg5[%c0_15, %c0_16], %21 {strides = array<i32>} : memref<16x128xf32, #tpu.memory_space<vmem>>, vector<16x128xf32>,
      %cst_17 = arith.constant 0.000000e+00 : f32
      %23 = vector.broadcast %cst_17 : f32 to vector<16x128xf32>
      %c0_18 = arith.constant 0 : index
      %c0_19 = arith.constant 0 : index
      %24 = vector.load %arg6[%c0_18, %c0_19] : memref<16x128xf32, #tpu.memory_space<vmem>>, vector<16x128xf32>
      tpu.vector_store %arg6[%c0_18, %c0_19], %23 {strides = array<i32>} : memref<16x128xf32, #tpu.memory_space<vmem>>, vector<16x128xf32>,
    } else {
    }
    %c0 = arith.constant 0 : index
    %c0_1 = arith.constant 0 : index
    %3 = vector.load %arg2[%c0, %c0_1] : memref<16x128xf32, #tpu.memory_space<vmem>>, vector<16x128xf32>
    %4 = arith.negf %3 : vector<16x128xf32>
    %5 = math.exp %4 : vector<16x128xf32>
    %cst = arith.constant 1.000000e+00 : f32
    %6 = vector.broadcast %cst : f32 to vector<16x128xf32>
    %7 = arith.addf %6, %5 : vector<16x128xf32>
    %8 = arith.divf %6, %7 : vector<16x128xf32>
    %c0_2 = arith.constant 0 : index
    %c0_3 = arith.constant 0 : index
    %9 = vector.load %arg3[%c0_2, %c0_3] : memref<16x128xf32, #tpu.memory_space<vmem>>, vector<16x128xf32>
    %c0_4 = arith.constant 0 : index
    %c0_5 = arith.constant 0 : index
    %10 = vector.load %arg5[%c0_4, %c0_5] : memref<16x128xf32, #tpu.memory_space<vmem>>, vector<16x128xf32>
    %11 = arith.mulf %8, %9 : vector<16x128xf32>
    %12 = arith.addf %10, %11 : vector<16x128xf32>
    %c0_6 = arith.constant 0 : index
    %c0_7 = arith.constant 0 : index
    %13 = vector.load %arg5[%c0_6, %c0_7] : memref<16x128xf32, #tpu.memory_space<vmem>>, vector<16x128xf32>
    tpu.vector_store %arg5[%c0_6, %c0_7], %12 {strides = array<i32>} : memref<16x128xf32, #tpu.memory_space<vmem>>, vector<16x128xf32>,
    %c0_8 = arith.constant 0 : index
    %c0_9 = arith.constant 0 : index
    %14 = vector.load %arg6[%c0_8, %c0_9] : memref<16x128xf32, #tpu.memory_space<vmem>>, vector<16x128xf32>
    %15 = arith.addf %8, %9 : vector<16x128xf32>
    %16 = arith.addf %14, %15 : vector<16x128xf32>
    %c0_10 = arith.constant 0 : index
    %c0_11 = arith.constant 0 : index
    %17 = vector.load %arg6[%c0_10, %c0_11] : memref<16x128xf32, #tpu.memory_space<vmem>>, vector<16x128xf32>
    tpu.vector_store %arg6[%c0_10, %c0_11], %16 {strides = array<i32>} : memref<16x128xf32, #tpu.memory_space<vmem>>, vector<16x128xf32>,
    %c0_i32_12 = arith.constant 0 : i32
    %18 = arith.cmpi eq, %arg1, %c0_i32_12 : i32
    %19 = arith.extui %18 : i1 to i32
    %c0_i32_13 = arith.constant 0 : i32
    %20 = arith.cmpi ne, %19, %c0_i32_13 : i32
    scf.if %20 {
      %c0_14 = arith.constant 0 : index
      %c0_15 = arith.constant 0 : index
      %21 = vector.load %arg5[%c0_14, %c0_15] : memref<16x128xf32, #tpu.memory_space<vmem>>, vector<16x128xf32>
      %22 = vector.shape_cast %21 : vector<16x128xf32> to vector<1x16x128xf32>
      %cst_16 = arith.constant dense<0.000000e+00> : vector<1xf32>
      %23 = vector.multi_reduction <add>, %22, %cst_16 [1, 2] : vector<1x16x128xf32> to vector<1xf32>
      %24 = vector.shape_cast %23 : vector<1xf32> to vector<1x1x1xf32>
      %25 = vector.extract %24[0, 0, 0] : f32 from vector<1x1x1xf32>
      %c0_17 = arith.constant 0 : index
      %c0_18 = arith.constant 0 : index
      %26 = vector.load %arg6[%c0_17, %c0_18] : memref<16x128xf32, #tpu.memory_space<vmem>>, vector<16x128xf32>
      %27 = vector.shape_cast %26 : vector<16x128xf32> to vector<1x16x128xf32>
      %cst_19 = arith.constant dense<0.000000e+00> : vector<1xf32>
      %28 = vector.multi_reduction <add>, %27, %cst_19 [1, 2] : vector<1x16x128xf32> to vector<1xf32>
      %29 = vector.shape_cast %28 : vector<1xf32> to vector<1x1x1xf32>
      %30 = vector.extract %29[0, 0, 0] : f32 from vector<1x1x1xf32>
      %31 = tpu.iota {dimensions = array<i32: 1>} : vector<1x8x128xi32>
      %c0_i32_20 = arith.constant 0 : i32
      %32 = vector.broadcast %c0_i32_20 : i32 to vector<1x8x128xi32>
      %33 = arith.cmpi eq, %31, %32 : vector<1x8x128xi32>
      %34 = vector.broadcast %25 : f32 to vector<1x8x128xf32>
      %35 = vector.broadcast %30 : f32 to vector<1x8x128xf32>
      %36 = arith.select %33, %34, %35 : vector<1x8x128xi1>, vector<1x8x128xf32>
      %c0_21 = arith.constant 0 : index
      %c0_22 = arith.constant 0 : index
      %c0_23 = arith.constant 0 : index
      %37 = vector.load %arg4[%c0_21, %c0_22, %c0_23] : memref<1x8x128xf32, #tpu.memory_space<vmem>>, vector<1x8x128xf32>
      tpu.vector_store %arg4[%c0_21, %c0_22, %c0_23], %36 {strides = array<i32>} : memref<1x8x128xf32, #tpu.memory_space<vmem>>, vector<1x8x128xf32>,
    } else {
    }
    return
  }
  func.func @transform_0(%arg0: i32, %arg1: i32) -> (i32, i32) {
    %c1_i32 = arith.constant 1 : i32
    %0 = arith.muli %arg0, %c1_i32 : i32
    %1 = arith.addi %0, %arg1 : i32
    %c0_i32 = arith.constant 0 : i32
    %2 = arith.minsi %1, %c0_i32 : i32
    %c0_i32_0 = arith.constant 0 : i32
    %c0_i32_1 = arith.constant 0 : i32
    return %2, %c0_i32_0 : i32, i32
  }
  func.func @transform_1(%arg0: i32, %arg1: i32) -> (i32, i32) {
    %c1_i32 = arith.constant 1 : i32
    %0 = arith.muli %arg0, %c1_i32 : i32
    %1 = arith.addi %0, %arg1 : i32
    %c0_i32 = arith.constant 0 : i32
    %2 = arith.minsi %1, %c0_i32 : i32
    %c0_i32_0 = arith.constant 0 : i32
    %c0_i32_1 = arith.constant 0 : i32
    return %2, %c0_i32_0 : i32, i32
  }
  func.func @transform_2(%arg0: i32, %arg1: i32) -> (i32, i32, i32) {
    %c0_i32 = arith.constant 0 : i32
    %c0_i32_0 = arith.constant 0 : i32
    %c0_i32_1 = arith.constant 0 : i32
    return %arg0, %c0_i32, %c0_i32_0 : i32, i32, i32
  }
}

</mosaic_0001>

<llo_original>
// kernel: tpu_custom_call.1
$region0: #{tpu_custom_call.1}
  #allocation0 [shape = 'u32[]', space=smem, size = 0x4, offset = 0x4, fixed_abs, tag = 'smem constant byte address 0x4 - core index']
  #allocation1 [shape = 'u32[144,128]{1,0:T(1,128)}', space=vmem, size = 0x12000, scoped, tag = 'internal scratch']
  #allocation2 [shape = 'f32[16,128]{1,0:T(8,128)}', space=vmem, size = 0x2000, scoped, tag = 'scratch operand']
  #allocation3 [shape = 'f32[16,128]{1,0:T(8,128)}', space=vmem, size = 0x2000, scoped, tag = 'scratch operand']
  %s0 = inlined_call_operand.hbm [shape: f32[16,128], index: 0, kind: input, shape index: {}]
  %s1 = inlined_call_operand.hbm [shape: f32[16,128], index: 1, kind: input, shape index: {}]
  %s2 = inlined_call_operand.hbm [shape: f32[1,8,128], index: 2, kind: output, shape index: {}]
  %s3 = sld [smem:[#allocation0]]
  $region34: #{tpu_custom_call.1} parent=0
    _
  %s5 = ssub.s32 1, %s3
  %s6 = scalar_select 0, %s5, %s3
  $region1: #{tpu_custom_call.1} parent=0
    #allocation4 [shape = 'u8[8192]{0}', space=vmem, size = 0x2000, scoped, tag = 'input window, operand 0, single buffered']
    #allocation5 [shape = 's32[1]{0}', space=sflag, size = 0x4, scoped, tag = 'scoped memory for tpu_custom_call.1']
    #allocation6 [shape = 's32[1]{0}', space=sflag, size = 0x4, scoped, tag = 'scoped memory for tpu_custom_call.1']
    #allocation7 [shape = 'u8[8192]{0}', space=vmem, size = 0x2000, scoped, tag = 'input window, operand 1, single buffered']
    #allocation8 [shape = 's32[1]{0}', space=sflag, size = 0x4, scoped, tag = 'scoped memory for tpu_custom_call.1']
    #allocation9 [shape = 'u8[4096]{0}', space=vmem, size = 0x1000, scoped, tag = 'output window, operand 0, single buffered']
    %7 = vsyncpa [#allocation5], 0
    %8 = vsyncpa [#allocation8], 0
    %9 = vsyncpa [#allocation6], 0
    // Predicated region
    $region2: #{tpu_custom_call.1} parent=1 // pred_check
      _
    $region3: #{tpu_custom_call.1} parent=1 // pred_check_branch
      %11 = sbr.rel (0) target = $region5
    $region4: #{tpu_custom_call.1} parent=1 // pred_region
      %s12 = sadd.s32 0, 0
      %p13 = scmp.lt.s32.totalorder %s12, 0
      %s14 = scalar_select %p13, %s12, 0
      %s15 = smul.u32 2, %s14
      %s17 = ssub.s32 256, 256
      %18 = vsyncadd [#allocation5], %s17
      %s19 = smul.addr %s15, 128
      %s20 = scalar_lea.hbm %s0, %s19
      %s21 = sshll.u32 [#allocation4], 4
      %s22 = int_to_ptr.vmem [resolvable:$true] %s21
      %27 = dma.hbm_to_vmem [thread:$0]  %s20, 256, %s22, [#allocation5], 128, 128, 8
    $region5: #{tpu_custom_call.1} parent=1 // pred_fallthru
      _
    // Predicated region
    $region6: #{tpu_custom_call.1} parent=1 // pred_check
      _
    $region7: #{tpu_custom_call.1} parent=1 // pred_check_branch
      %29 = sbr.rel (0) target = $region9
    $region8: #{tpu_custom_call.1} parent=1 // pred_region
      %s30 = sadd.s32 0, 0
      %p31 = scmp.lt.s32.totalorder %s30, 0
      %s32 = scalar_select %p31, %s30, 0
      %s33 = smul.u32 2, %s32
      %s35 = ssub.s32 256, 256
      %36 = vsyncadd [#allocation8], %s35
      %s37 = smul.addr %s33, 128
      %s38 = scalar_lea.hbm %s1, %s37
      %s39 = sshll.u32 [#allocation7], 4
      %s40 = int_to_ptr.vmem [resolvable:$true] %s39
      %45 = dma.hbm_to_vmem [thread:$0]  %s38, 256, %s40, [#allocation8], 128, 128, 8
    $region9: #{tpu_custom_call.1} parent=1 // pred_fallthru
      _
    // Predicated region
    $region10: #{tpu_custom_call.1} parent=1 // pred_check
      _
    $region11: #{tpu_custom_call.1} parent=1 // pred_check_branch
      %47 = sbr.rel (0) target = $region13
    $region12: #{tpu_custom_call.1} parent=1 // pred_region
      %48 = dma.done [#allocation5], 256
    $region13: #{tpu_custom_call.1} parent=1 // pred_fallthru
      _
    // Predicated region
    $region14: #{tpu_custom_call.1} parent=1 // pred_check
      _
    $region15: #{tpu_custom_call.1} parent=1 // pred_check_branch
      %50 = sbr.rel (0) target = $region17
    $region16: #{tpu_custom_call.1} parent=1 // pred_region
      %51 = dma.done [#allocation8], 256
    $region17: #{tpu_custom_call.1} parent=1 // pred_fallthru
      _
    %s52 = sadd.s32 0, 0
    %p53 = scmp.lt.s32.totalorder %s52, 0
    %s54 = scalar_select %p53, %s52, 0
    %s55 = smul.u32 2, %s54
    %s56 = sadd.s32 0, 0
    %p57 = scmp.lt.s32.totalorder %s56, 0
    %s58 = scalar_select %p57, %s56, 0
    %s59 = smul.u32 2, %s58
    %p60 = scmp.eq.s32.totalorder 0, 0
    // Predicated region
    $region18: #{tpu_custom_call.1} parent=1 // pred_check
      %p61 = pneg %p60
    $region19: #{tpu_custom_call.1} parent=1 // pred_check_branch
      %63 = sbr.rel (%p61) target = $region21
    $region20: #{tpu_custom_call.1} parent=1 // pred_region
      %64 = vst [vmem:[#allocation2] sm:$0xff] 0.0
      %65 = vst [vmem:[#allocation2 + $0x8] sm:$0xff] 0.0
      %66 = vst [vmem:[#allocation3] sm:$0xff] 0.0
      %67 = vst [vmem:[#allocation3 + $0x8] sm:$0xff] 0.0
    $region21: #{tpu_custom_call.1} parent=1 // pred_fallthru
      _
    %v68 = vld [vmem:[#allocation4] sm:$0xff]
    %v69 = vld [vmem:[#allocation4 + $0x8] sm:$0xff]
    %v70 = vxor.u32 %v68, 2147483648
    %v71 = vxor.u32 %v69, 2147483648
    %v72 = vmul.f32 %v70, 1.442695
    %v73 = vpow.pop %v72
    %v74 = vmul.f32 %v71, 1.442695
    %v75 = vpow.pop %v74
    %v76 = vadd.f32 %v73, 1.0
    %v77 = vadd.f32 %v75, 1.0
    %v78 = vrcp.pop %v76
    %v79 = vmul.f32 1.0, %v78
    %v80 = vrcp.pop %v77
    %v81 = vmul.f32 1.0, %v80
    %v82 = vld [vmem:[#allocation7] sm:$0xff]
    %v83 = vld [vmem:[#allocation7 + $0x8] sm:$0xff]
    %v84 = vld [vmem:[#allocation2] sm:$0xff]
    %v85 = vld [vmem:[#allocation2 + $0x8] sm:$0xff]
    %v86 = vmul.f32 %v79, %v82
    %v87 = vmul.f32 %v81, %v83
    %v88 = vadd.f32 %v84, %v86
    %v89 = vadd.f32 %v85, %v87
    %90 = vst [vmem:[#allocation2] sm:$0xff] %v88
    %91 = vst [vmem:[#allocation2 + $0x8] sm:$0xff] %v89
    %v92 = vld [vmem:[#allocation3] sm:$0xff]
    %v93 = vld [vmem:[#allocation3 + $0x8] sm:$0xff]
    %v94 = vadd.f32 %v79, %v82
    %v95 = vadd.f32 %v81, %v83
    %v96 = vadd.f32 %v92, %v94
    %v97 = vadd.f32 %v93, %v95
    %98 = vst [vmem:[#allocation3] sm:$0xff] %v96
    %99 = vst [vmem:[#allocation3 + $0x8] sm:$0xff] %v97
    // Predicated region
    $region22: #{tpu_custom_call.1} parent=1 // pred_check
      %p100 = pneg %p60
    $region23: #{tpu_custom_call.1} parent=1 // pred_check_branch
      %102 = sbr.rel (%p100) target = $region25
    $region24: #{tpu_custom_call.1} parent=1 // pred_region
      %v103 = vld [vmem:[#allocation2] sm:$0xff]
      %v104 = vld [vmem:[#allocation2 + $0x8] sm:$0xff]
      %v105 = vadd.f32 %v103, %v104
      %106 = vadd.xlane.f32.xlu0 %v105
      %v107 = vpop.xlane.xlu0 %106
      %v108 = vrot.slane %v107, 4
      %v109 = vadd.f32 %v107, %v108
      %v110 = vrot.slane %v109, 2
      %v111 = vadd.f32 %v109, %v110
      %v112 = vrot.slane %v111, 1
      %v113 = vadd.f32 %v111, %v112
      %s114 = vtos %v113
      %v115 = vld [vmem:[#allocation3] sm:$0xff]
      %v116 = vld [vmem:[#allocation3 + $0x8] sm:$0xff]
      %v117 = vadd.f32 %v115, %v116
      %118 = vadd.xlane.f32.xlu0 %v117
      %v119 = vpop.xlane.xlu0 %118
      %v120 = vrot.slane %v119, 4
      %v121 = vadd.f32 %v119, %v120
      %v122 = vrot.slane %v121, 2
      %v123 = vadd.f32 %v121, %v122
      %v124 = vrot.slane %v123, 1
      %v125 = vadd.f32 %v123, %v124
      %s126 = vtos %v125
      %v127 = vlaneseq
      %v128 = vshrl.u32 %v127, 7
      %vm129 = vcmp.eq.s32.totalorder %v128, 0
      %v130 = vstv %s114
      %v131 = vstv %s126
      %v132 = vsel %vm129, %v130, %v131
      %133 = vst [vmem:[#allocation9] sm:$0xff] %v132
    $region25: #{tpu_custom_call.1} parent=1 // pred_fallthru
      _
    // Predicated region
    $region26: #{tpu_custom_call.1} parent=1 // pred_check
      _
    $region27: #{tpu_custom_call.1} parent=1 // pred_check_branch
      %135 = sbr.rel (0) target = $region29
    $region28: #{tpu_custom_call.1} parent=1 // pred_region
      %s137 = ssub.s32 128, 128
      %138 = vsyncadd [#allocation6], %s137
      %s140 = sshll.u32 [#allocation9], 4
      %s141 = int_to_ptr.vmem [resolvable:$true] %s140
      %143 = dma.vmem_to_hbm [thread:$0]  %s141, 128, %s2, [#allocation6]
    $region29: #{tpu_custom_call.1} parent=1 // pred_fallthru
      _
    // Predicated region
    $region30: #{tpu_custom_call.1} parent=1 // pred_check
      _
    $region31: #{tpu_custom_call.1} parent=1 // pred_check_branch
      %145 = sbr.rel (0) target = $region33
    $region32: #{tpu_custom_call.1} parent=1 // pred_region
      %146 = dma.done [#allocation6], 128
    $region33: #{tpu_custom_call.1} parent=1 // pred_fallthru
      _
    %147 = vsyncpa [#allocation5], 1
    %148 = vsyncpa [#allocation8], 1
    %149 = vsyncpa [#allocation6], 1

</llo_original>
